<compile_context>
chip_gen: v7x
topology: tpu7x:2x2x1
jax: 0.10.0
libtpu: 0.0.40
codegen_flags: <defaults>
</compile_context>

<pallas_src>
import functools

import jax
import jax.numpy as jnp
from jax import lax
from jax.experimental import pallas as pl
from jax.experimental.pallas import tpu as pltpu

_LANES = 128
_SUBLANES = 8


def _ceil_to(n, m):
    return (n + m - 1) // m * m


def _upsample1d_kernel(x_ref, w_ref, gb_ref, o_ref, xp_scr, *,
                       c_in, c_in_pad, c_half, c_half_pad, k_size, stride,
                       pad, t_in, t_out, t_out_pad, t_scr, eps,
                       use_im2col, mxu_dtype):
    # x_ref:  (1, c_in, t_in)                 current batch element (unpadded)
    # w_ref:  (2*c_half_pad, K*c_in_pad)      if use_im2col  (single stacked matmul)
    #         (K, 2*c_half_pad, c_in_pad)     otherwise      (per-tap accumulation)
    #         rows [0:c_half] = even output channels, [c_half_pad:c_half_pad+c_half] = odd.
    # gb_ref: (c_half_pad, 2)                 [:, 0] = gamma, [:, 1] = beta
    # o_ref:  (1, c_half, 2*t_out)            exact-size output (pixel-shuffled layout)
    # xp_scr: (c_in_pad, t_scr)               zero-padded input copy (VMEM scratch)

    # ---- refresh the zero-padded input copy (rewritten every step: megacore-safe) -------
    xp_scr[...] = jnp.zeros_like(xp_scr)
    xp_scr[0:c_in, pl.ds(pad, t_in)] = x_ref[0]

    def _tap(k):
        # (c_in_pad, t_out_pad) window of the padded input for conv tap k.
        if stride == 1:
            xk = xp_scr[:, pl.ds(k, t_out_pad)]
        else:
            # TODO(synk): strided lane slice is a relayout; decompose into per-phase
            # contiguous slices if stride > 1 ever becomes a hot path.
            xk = lax.slice(xp_scr[...], (0, k),
                           (c_in_pad, k + stride * (t_out_pad - 1) + 1), (1, stride))
        return xk if mxu_dtype is None else xk.astype(mxu_dtype)

    # ---- Conv1d: one stacked even|odd MXU matmul, f32 accumulation ----------------------
    if use_im2col:
        windows = jnp.concatenate([_tap(k) for k in range(k_size)], axis=0)
        acc = jnp.dot(w_ref[...], windows, preferred_element_type=jnp.float32)
    else:
        acc = jnp.dot(w_ref[0], _tap(0), preferred_element_type=jnp.float32)
        for k in range(1, k_size):
            acc = acc + jnp.dot(w_ref[k], _tap(k), preferred_element_type=jnp.float32)

    # ---- InstanceNorm1d stats over the 2*t_out pixel-shuffled time axis -----------------
    if t_out != t_out_pad:
        lane = lax.broadcasted_iota(jnp.int32, acc.shape, 1)
        acc = jnp.where(lane < t_out, acc, 0.0)        # mask once; rest of math unmasked
    inv_n = 1.0 / (2 * t_out)
    row_s = jnp.sum(acc, axis=1, keepdims=True)        # (2*c_half_pad, 1)
    row_q = jnp.sum(acc * acc, axis=1, keepdims=True)
    mean = (row_s[:c_half_pad] + row_s[c_half_pad:]) * inv_n
    var = (row_q[:c_half_pad] + row_q[c_half_pad:]) * inv_n - mean * mean
    scale = lax.rsqrt(var + eps) * gb_ref[:, 0:1]
    shift = gb_ref[:, 1:2] - mean * scale

    # ---- affine + GLU (x * sigmoid(x)); store straight into the exact-size output -------
    ze = acc[:c_half_pad] * scale + shift
    zo = acc[c_half_pad:] * scale + shift
    ge = ze * jax.nn.sigmoid(ze)
    go = zo * jax.nn.sigmoid(zo)
    o_ref[0, :, 0:t_out] = ge[0:c_half, 0:t_out].astype(o_ref.dtype)
    o_ref[0, :, t_out:2 * t_out] = go[0:c_half, 0:t_out].astype(o_ref.dtype)


def upsample1d_block(x, weight, gamma, beta, *, kernel_size, stride, padding,
                     eps=1e-5, mxu_dtype=None):
    """x: (B, C_in, T). weight: (C_out, C_in, K) (bias=False). gamma/beta: (C_out//2,).

    mxu_dtype: optional matmul-operand dtype (e.g. jnp.bfloat16 for v5e's bf16-native MXU);
    default None keeps f32 operands so the 1e-4 accuracy check holds. Accumulation is f32
    either way.
    """
    B, c_in, t_in = x.shape
    c_out = weight.shape[0]
    c_half = c_out // 2
    t_out = (t_in + 2 * padding - kernel_size) // stride + 1

    c_in_pad = _ceil_to(c_in, _SUBLANES)
    c_half_pad = _ceil_to(c_half, _SUBLANES)
    t_out_pad = _ceil_to(t_out, _LANES)
    t_scr = _ceil_to(max(kernel_size + stride * (t_out_pad - 1),
                         t_in + 2 * padding), _LANES)

    # ---- generation-aware VMEM capacity --------------------------------------------------
    try:
        vmem_cap = int(pltpu.get_tpu_info().vmem_capacity_bytes)
    except Exception:                       # non-TPU backend / older runtime: assume v7x-like
        vmem_cap = 64 << 20

    isz = x.dtype.itemsize
    win_isz = isz if mxu_dtype is None else jnp.dtype(mxu_dtype).itemsize

    def _tile(rows, cols, bytes_per):       # VMEM footprint of a (rows, cols) buffer
        return _ceil_to(rows, _SUBLANES) * _ceil_to(cols, _LANES) * bytes_per

    # im2col materializes a (K*c_in_pad, t_out_pad) window matrix (plus the concat copy);
    # fall back to K accumulating per-tap matmuls when that would strain VMEM (v7x: 64 MiB).
    windows_bytes = _tile(kernel_size * c_in_pad, t_out_pad, win_isz)
    use_im2col = windows_bytes <= min(4 << 20, vmem_cap // 16)

    # ---- glue: stacked even|odd weight, padded to sublane-aligned shapes -----------------
    w_even, w_odd = weight[0::2], weight[1::2]          # (c_half, c_in, K) each
    if use_im2col:
        def _prep(w):                                   # -> (c_half_pad, K*c_in_pad)
            w = jnp.transpose(w, (0, 2, 1))             # (c_half, K, c_in), tap-major cols
            w = jnp.pad(w, ((0, c_half_pad - c_half), (0, 0), (0, c_in_pad - c_in)))
            return w.reshape(c_half_pad, kernel_size * c_in_pad)
        w_stacked = jnp.concatenate([_prep(w_even), _prep(w_odd)], axis=0)
        w_block = (2 * c_half_pad, kernel_size * c_in_pad)
        w_index_map = lambda b: (0, 0)
    else:
        def _prep(w):                                   # -> (K, c_half_pad, c_in_pad)
            w = jnp.transpose(w, (2, 0, 1))
            return jnp.pad(w, ((0, 0), (0, c_half_pad - c_half), (0, c_in_pad - c_in)))
        w_stacked = jnp.concatenate([_prep(w_even), _prep(w_odd)], axis=1)
        w_block = (kernel_size, 2 * c_half_pad, c_in_pad)
        w_index_map = lambda b: (0, 0, 0)
    if mxu_dtype is not None:
        w_stacked = w_stacked.astype(mxu_dtype)

    gb = jnp.stack(
        [jnp.pad(gamma.astype(jnp.float32), (0, c_half_pad - c_half), constant_values=1.0),
         jnp.pad(beta.astype(jnp.float32), (0, c_half_pad - c_half))],
        axis=1)                                         # (c_half_pad, 2)

    # ---- explicit VMEM budget (blocks + scratch + in-kernel temporaries) -----------------
    if use_im2col:
        w_bytes = _tile(2 * c_half_pad, kernel_size * c_in_pad, w_stacked.dtype.itemsize)
    else:
        w_bytes = kernel_size * _tile(2 * c_half_pad, c_in_pad, w_stacked.dtype.itemsize)
    acc_bytes = _tile(2 * c_half_pad, t_out_pad, 4)
    tmp_bytes = 4 * _tile(c_half_pad, t_out_pad, 4)     # ze/zo/ge/go-style f32 temporaries
    budget = (2 * _tile(c_in, t_in, isz)                # double-buffered input blocks
              + 1 * w_bytes                             # single-buffered constant weight
              + 1 * _tile(c_half_pad, 2, 4)             # single-buffered gamma/beta
              + 2 * _tile(c_half, 2 * t_out, isz)       # double-buffered output blocks
              + _tile(c_in_pad, t_scr, isz)             # padded-input scratch
              + (windows_bytes if use_im2col else 0)
              + acc_bytes + tmp_bytes)
    vmem_limit = int(min(max(budget + budget // 2 + (8 << 20), 32 << 20),
                         vmem_cap - vmem_cap // 8))     # ~56 MiB on v7x, ~112 MiB on v5e/v6e

    kernel = functools.partial(
        _upsample1d_kernel,
        c_in=c_in, c_in_pad=c_in_pad, c_half=c_half, c_half_pad=c_half_pad,
        k_size=kernel_size, stride=stride, pad=padding, t_in=t_in,
        t_out=t_out, t_out_pad=t_out_pad, t_scr=t_scr, eps=eps,
        use_im2col=use_im2col, mxu_dtype=mxu_dtype)

    # TODO(synk): for very large T add a time-tiled two-sweep grid (per-step VMEM no longer
    # scales with T); for large B with tiny per-element work, block several batch elements
    # per grid step to amortize the ~0.35 us per-step overhead and fill MXU lanes.
    def _run(single_buffer_consts):
        const_kw = ({"pipeline_mode": pl.Buffered(1)} if single_buffer_consts else {})
        grid_spec = pltpu.PrefetchScalarGridSpec(
            num_scalar_prefetch=0,
            grid=(B,),
            in_specs=[
                pl.BlockSpec((1, c_in, t_in), lambda b: (b, 0, 0)),
                pl.BlockSpec(w_block, w_index_map, **const_kw),
                pl.BlockSpec((c_half_pad, 2), lambda b: (0, 0), **const_kw),
            ],
            out_specs=pl.BlockSpec((1, c_half, 2 * t_out), lambda b: (b, 0, 0)),
            scratch_shapes=[pltpu.VMEM((c_in_pad, t_scr), x.dtype)],
        )
        return pl.pallas_call(
            kernel,
            out_shape=jax.ShapeDtypeStruct((B, c_half, 2 * t_out), x.dtype),
            grid_spec=grid_spec,
            compiler_params=pltpu.CompilerParams(
                dimension_semantics=("parallel",),
                vmem_limit_bytes=vmem_limit),
        )(x, w_stacked, gb)

    try:
        # Constant-index blocks: single-buffer to halve their VMEM footprint.
        return _run(True)
    except Exception:
        # Fallback if this jax build rejects Buffered(1); real kernel errors re-raise here.
        return _run(False)


def _reference(x, weight, gamma, beta, *, kernel_size, stride, padding, eps=1e-5):
    # pure-JAX reference mirroring the PyTorch forward
    out = lax.conv_general_dilated(
        x, weight, window_strides=(stride,), padding=[(padding, padding)],
        dimension_numbers=("NCH", "OIH", "NCH"))
    b, c, t = out.shape
    out = out.reshape(b, c // 2, 2 * t)                        # pixel_shuffle (view)
    mean = out.mean(axis=2, keepdims=True)
    var = ((out - mean) ** 2).mean(axis=2, keepdims=True)
    out = (out - mean) / jnp.sqrt(var + eps)
    out = out * gamma.reshape(1, -1, 1) + beta.reshape(1, -1, 1)
    return out * jax.nn.sigmoid(out)


if __name__ == "__main__":
    B, dim_in, dim_out, T = 2, 4, 8, 16
    kernel_size, stride, padding = 5, 1, 2

    key = jax.random.PRNGKey(0)
    k1, k2, k3, k4 = jax.random.split(key, 4)
    x = jax.random.normal(k1, (B, dim_in, T), dtype=jnp.float32)
    weight = jax.random.normal(k2, (dim_out, dim_in, kernel_size),
                               dtype=jnp.float32) * 0.2
    gamma = 1.0 + 0.1 * jax.random.normal(k3, (dim_out // 2,), dtype=jnp.float32)
    beta = 0.1 * jax.random.normal(k4, (dim_out // 2,), dtype=jnp.float32)

    out = upsample1d_block(x, weight, gamma, beta,
                           kernel_size=kernel_size, stride=stride,
                           padding=padding)
    out = jax.block_until_ready(out)

    ref = _reference(x, weight, gamma, beta,
                     kernel_size=kernel_size, stride=stride, padding=padding)
    t_out = (T + 2 * padding - kernel_size) // stride + 1
    assert out.shape == (B, dim_out // 2, 2 * t_out), out.shape
    assert jnp.max(jnp.abs(out - ref)) < 1e-4

    print("KERNEL_OK")
</pallas_src>

<mosaic_0001>
module attributes {stable_mosaic.version = 11 : i64} {
  func.func @_upsample1d_kernel(%arg0: i32, %arg1: memref<1x4x16xf32, #tpu.memory_space<vmem>>, %arg2: memref<16x40xf32, #tpu.memory_space<vmem>>, %arg3: memref<8x2xf32, #tpu.memory_space<vmem>>, %arg4: memref<1x4x32xf32, #tpu.memory_space<vmem>>, %arg5: memref<8x256xf32, #tpu.memory_space<vmem>>) attributes {dimension_semantics = [#tpu.dimension_semantics<parallel>], iteration_bounds = array<i64: 2>, scalar_prefetch = 0 : i64, scratch_operands = 1 : i64, tpu.core_type = #tpu.core_type<tc>, window_params = [{transform_indices = @transform_0, window_bounds = array<i64: 1, 4, 16>}, {pipeline_mode = #tpu.pipeline_mode<synchronous>, transform_indices = @transform_1, window_bounds = array<i64: 16, 40>}, {pipeline_mode = #tpu.pipeline_mode<synchronous>, transform_indices = @transform_2, window_bounds = array<i64: 8, 2>}, {transform_indices = @transform_3, window_bounds = array<i64: 1, 4, 32>}]} {
    %cst = arith.constant 0.000000e+00 : f32
    %0 = vector.broadcast %cst : f32 to vector<8x256xf32>
    %c0 = arith.constant 0 : index
    %c0_0 = arith.constant 0 : index
    %1 = vector.load %arg5[%c0, %c0_0] : memref<8x256xf32, #tpu.memory_space<vmem>>, vector<8x256xf32>
    tpu.vector_store %arg5[%c0, %c0_0], %0 {strides = array<i32>} : memref<8x256xf32, #tpu.memory_space<vmem>>, vector<8x256xf32>,
    %c0_1 = arith.constant 0 : index
    %c0_2 = arith.constant 0 : index
    %c0_3 = arith.constant 0 : index
    %2 = vector.load %arg1[%c0_1, %c0_2, %c0_3] : memref<1x4x16xf32, #tpu.memory_space<vmem>>, vector<1x4x16xf32>
    %3 = vector.shape_cast %2 : vector<1x4x16xf32> to vector<4x16xf32>
    %c0_4 = arith.constant 0 : index
    %c2 = arith.constant 2 : index
    %4 = vector.load %arg5[%c0_4, %c2] : memref<8x256xf32, #tpu.memory_space<vmem>>, vector<4x16xf32>
    tpu.vector_store %arg5[%c0_4, %c2], %3 {strides = array<i32>} : memref<8x256xf32, #tpu.memory_space<vmem>>, vector<4x16xf32>,
    %c0_5 = arith.constant 0 : index
    %c0_6 = arith.constant 0 : index
    %5 = vector.load %arg5[%c0_5, %c0_6] : memref<8x256xf32, #tpu.memory_space<vmem>>, vector<8x128xf32>
    %c0_7 = arith.constant 0 : index
    %c1 = arith.constant 1 : index
    %6 = vector.load %arg5[%c0_7, %c1] : memref<8x256xf32, #tpu.memory_space<vmem>>, vector<8x128xf32>
    %c0_8 = arith.constant 0 : index
    %c2_9 = arith.constant 2 : index
    %7 = vector.load %arg5[%c0_8, %c2_9] : memref<8x256xf32, #tpu.memory_space<vmem>>, vector<8x128xf32>
    %c0_10 = arith.constant 0 : index
    %c3 = arith.constant 3 : index
    %8 = vector.load %arg5[%c0_10, %c3] : memref<8x256xf32, #tpu.memory_space<vmem>>, vector<8x128xf32>
    %c0_11 = arith.constant 0 : index
    %c4 = arith.constant 4 : index
    %9 = vector.load %arg5[%c0_11, %c4] : memref<8x256xf32, #tpu.memory_space<vmem>>, vector<8x128xf32>
    %10 = tpu.concatenate %5, %6, %7, %8, %9 in 0 : vector<8x128xf32>, vector<8x128xf32>, vector<8x128xf32>, vector<8x128xf32>, vector<8x128xf32> -> vector<40x128xf32>
    %c0_12 = arith.constant 0 : index
    %c0_13 = arith.constant 0 : index
    %11 = vector.load %arg2[%c0_12, %c0_13] : memref<16x40xf32, #tpu.memory_space<vmem>>, vector<16x40xf32>
    %cst_14 = arith.constant dense<0.000000e+00> : vector<16x128xf32>
    %12 = tpu.matmul %11, %10, %cst_14 {dimension_numbers = #tpu.dot_dimension_numbers<[1], [0], [0], [1], [0, 0, 1, 1], [], []>} : vector<16x40xf32>, vector<40x128xf32>, vector<16x128xf32> -> vector<16x128xf32>
    %13 = tpu.iota {dimensions = array<i32: 1>} : vector<16x128xi32>
    %c16_i32 = arith.constant 16 : i32
    %14 = vector.broadcast %c16_i32 : i32 to vector<16x128xi32>
    %15 = arith.cmpi slt, %13, %14 : vector<16x128xi32>
    %cst_15 = arith.constant 0.000000e+00 : f32
    %16 = vector.broadcast %cst_15 : f32 to vector<16x128xf32>
    %17 = arith.select %15, %12, %16 : vector<16x128xi1>, vector<16x128xf32>
    %cst_16 = arith.constant dense<0.000000e+00> : vector<16xf32>
    %18 = vector.multi_reduction <add>, %17, %cst_16 [1] : vector<16x128xf32> to vector<16xf32>
    %19 = vector.shape_cast %18 : vector<16xf32> to vector<16x1xf32>
    %20 = arith.mulf %17, %17 : vector<16x128xf32>
    %cst_17 = arith.constant dense<0.000000e+00> : vector<16xf32>
    %21 = vector.multi_reduction <add>, %20, %cst_17 [1] : vector<16x128xf32> to vector<16xf32>
    %22 = vector.shape_cast %21 : vector<16xf32> to vector<16x1xf32>
    %23 = vector.extract_strided_slice %19 {offsets = [0, 0], sizes = [8, 1], strides = [1, 1]} : vector<16x1xf32> to vector<8x1xf32>
    %24 = vector.extract_strided_slice %19 {offsets = [8, 0], sizes = [8, 1], strides = [1, 1]} : vector<16x1xf32> to vector<8x1xf32>
    %25 = arith.addf %23, %24 : vector<8x1xf32>
    %cst_18 = arith.constant 3.125000e-02 : f32
    %26 = vector.broadcast %cst_18 : f32 to vector<8x1xf32>
    %27 = arith.mulf %25, %26 : vector<8x1xf32>
    %28 = vector.extract_strided_slice %22 {offsets = [0, 0], sizes = [8, 1], strides = [1, 1]} : vector<16x1xf32> to vector<8x1xf32>
    %29 = vector.extract_strided_slice %22 {offsets = [8, 0], sizes = [8, 1], strides = [1, 1]} : vector<16x1xf32> to vector<8x1xf32>
    %30 = arith.addf %28, %29 : vector<8x1xf32>
    %cst_19 = arith.constant 3.125000e-02 : f32
    %31 = vector.broadcast %cst_19 : f32 to vector<8x1xf32>
    %32 = arith.mulf %30, %31 : vector<8x1xf32>
    %33 = arith.mulf %27, %27 : vector<8x1xf32>
    %34 = arith.subf %32, %33 : vector<8x1xf32>
    %cst_20 = arith.constant 9.99999974E-6 : f32
    %35 = vector.broadcast %cst_20 : f32 to vector<8x1xf32>
    %36 = arith.addf %34, %35 : vector<8x1xf32>
    %37 = math.rsqrt %36 : vector<8x1xf32>
    %c0_21 = arith.constant 0 : index
    %c0_22 = arith.constant 0 : index
    %38 = vector.load %arg3[%c0_21, %c0_22] : memref<8x2xf32, #tpu.memory_space<vmem>>, vector<8x1xf32>
    %39 = arith.mulf %37, %38 : vector<8x1xf32>
    %c0_23 = arith.constant 0 : index
    %c1_24 = arith.constant 1 : index
    %40 = vector.load %arg3[%c0_23, %c1_24] : memref<8x2xf32, #tpu.memory_space<vmem>>, vector<8x1xf32>
    %41 = arith.mulf %27, %39 : vector<8x1xf32>
    %42 = arith.subf %40, %41 : vector<8x1xf32>
    %43 = vector.extract_strided_slice %17 {offsets = [0, 0], sizes = [8, 128], strides = [1, 1]} : vector<16x128xf32> to vector<8x128xf32>
    %44 = vector.broadcast %39 : vector<8x1xf32> to vector<8x128xf32>
    %45 = arith.mulf %43, %44 : vector<8x128xf32>
    %46 = vector.broadcast %42 : vector<8x1xf32> to vector<8x128xf32>
    %47 = arith.addf %45, %46 : vector<8x128xf32>
    %48 = vector.extract_strided_slice %17 {offsets = [8, 0], sizes = [8, 128], strides = [1, 1]} : vector<16x128xf32> to vector<8x128xf32>
    %49 = vector.broadcast %39 : vector<8x1xf32> to vector<8x128xf32>
    %50 = arith.mulf %48, %49 : vector<8x128xf32>
    %51 = vector.broadcast %42 : vector<8x1xf32> to vector<8x128xf32>
    %52 = arith.addf %50, %51 : vector<8x128xf32>
    %53 = arith.negf %47 : vector<8x128xf32>
    %54 = math.exp %53 : vector<8x128xf32>
    %cst_25 = arith.constant 1.000000e+00 : f32
    %55 = vector.broadcast %cst_25 : f32 to vector<8x128xf32>
    %56 = arith.addf %55, %54 : vector<8x128xf32>
    %57 = arith.divf %55, %56 : vector<8x128xf32>
    %58 = arith.mulf %47, %57 : vector<8x128xf32>
    %59 = arith.negf %52 : vector<8x128xf32>
    %60 = math.exp %59 : vector<8x128xf32>
    %cst_26 = arith.constant 1.000000e+00 : f32
    %61 = vector.broadcast %cst_26 : f32 to vector<8x128xf32>
    %62 = arith.addf %61, %60 : vector<8x128xf32>
    %63 = arith.divf %61, %62 : vector<8x128xf32>
    %64 = arith.mulf %52, %63 : vector<8x128xf32>
    %65 = vector.extract_strided_slice %58 {offsets = [0, 0], sizes = [4, 16], strides = [1, 1]} : vector<8x128xf32> to vector<4x16xf32>
    %c0_27 = arith.constant 0 : index
    %c0_28 = arith.constant 0 : index
    %c0_29 = arith.constant 0 : index
    %66 = vector.load %arg4[%c0_27, %c0_28, %c0_29] : memref<1x4x32xf32, #tpu.memory_space<vmem>>, vector<1x4x16xf32>
    %67 = vector.shape_cast %66 : vector<1x4x16xf32> to vector<4x16xf32>
    %68 = vector.shape_cast %65 : vector<4x16xf32> to vector<1x4x16xf32>
    tpu.vector_store %arg4[%c0_27, %c0_28, %c0_29], %68 {strides = array<i32>} : memref<1x4x32xf32, #tpu.memory_space<vmem>>, vector<1x4x16xf32>,
    %69 = vector.extract_strided_slice %64 {offsets = [0, 0], sizes = [4, 16], strides = [1, 1]} : vector<8x128xf32> to vector<4x16xf32>
    %c0_30 = arith.constant 0 : index
    %c0_31 = arith.constant 0 : index
    %c16 = arith.constant 16 : index
    %70 = vector.load %arg4[%c0_30, %c0_31, %c16] : memref<1x4x32xf32, #tpu.memory_space<vmem>>, vector<1x4x16xf32>
    %71 = vector.shape_cast %70 : vector<1x4x16xf32> to vector<4x16xf32>
    %72 = vector.shape_cast %69 : vector<4x16xf32> to vector<1x4x16xf32>
    tpu.vector_store %arg4[%c0_30, %c0_31, %c16], %72 {strides = array<i32>} : memref<1x4x32xf32, #tpu.memory_space<vmem>>, vector<1x4x16xf32>,
    return
  }
  func.func @transform_0(%arg0: i32) -> (i32, i32, i32) {
    %c0_i32 = arith.constant 0 : i32
    %c0_i32_0 = arith.constant 0 : i32
    %c0_i32_1 = arith.constant 0 : i32
    return %arg0, %c0_i32, %c0_i32_0 : i32, i32, i32
  }
  func.func @transform_1(%arg0: i32) -> (i32, i32) {
    %c0_i32 = arith.constant 0 : i32
    %c0_i32_0 = arith.constant 0 : i32
    %c0_i32_1 = arith.constant 0 : i32
    return %c0_i32, %c0_i32_0 : i32, i32
  }
  func.func @transform_2(%arg0: i32) -> (i32, i32) {
    %c0_i32 = arith.constant 0 : i32
    %c0_i32_0 = arith.constant 0 : i32
    %c0_i32_1 = arith.constant 0 : i32
    return %c0_i32, %c0_i32_0 : i32, i32
  }
  func.func @transform_3(%arg0: i32) -> (i32, i32, i32) {
    %c0_i32 = arith.constant 0 : i32
    %c0_i32_0 = arith.constant 0 : i32
    %c0_i32_1 = arith.constant 0 : i32
    return %arg0, %c0_i32, %c0_i32_0 : i32, i32, i32
  }
}

module attributes {stable_mosaic.version = 11 : i64} {
  func.func @_upsample1d_kernel(%arg0: i32, %arg1: memref<1x4x16xf32, #tpu.memory_space<vmem>>, %arg2: memref<16x40xf32, #tpu.memory_space<vmem>>, %arg3: memref<8x2xf32, #tpu.memory_space<vmem>>, %arg4: memref<1x4x32xf32, #tpu.memory_space<vmem>>, %arg5: memref<8x256xf32, #tpu.memory_space<vmem>>) attributes {dimension_semantics = [#tpu.dimension_semantics<parallel>], iteration_bounds = array<i64: 2>, scalar_prefetch = 0 : i64, scratch_operands = 1 : i64, tpu.core_type = #tpu.core_type<tc>, window_params = [{transform_indices = @transform_0, window_bounds = array<i64: 1, 4, 16>}, {pipeline_mode = #tpu.pipeline_mode<synchronous>, transform_indices = @transform_1, window_bounds = array<i64: 16, 40>}, {pipeline_mode = #tpu.pipeline_mode<synchronous>, transform_indices = @transform_2, window_bounds = array<i64: 8, 2>}, {transform_indices = @transform_3, window_bounds = array<i64: 1, 4, 32>}]} {
    %cst = arith.constant 0.000000e+00 : f32
    %0 = vector.broadcast %cst : f32 to vector<8x256xf32>
    %c0 = arith.constant 0 : index
    %c0_0 = arith.constant 0 : index
    %1 = vector.load %arg5[%c0, %c0_0] : memref<8x256xf32, #tpu.memory_space<vmem>>, vector<8x256xf32>
    tpu.vector_store %arg5[%c0, %c0_0], %0 {strides = array<i32>} : memref<8x256xf32, #tpu.memory_space<vmem>>, vector<8x256xf32>,
    %c0_1 = arith.constant 0 : index
    %c0_2 = arith.constant 0 : index
    %c0_3 = arith.constant 0 : index
    %2 = vector.load %arg1[%c0_1, %c0_2, %c0_3] : memref<1x4x16xf32, #tpu.memory_space<vmem>>, vector<1x4x16xf32>
    %3 = vector.shape_cast %2 : vector<1x4x16xf32> to vector<4x16xf32>
    %c0_4 = arith.constant 0 : index
    %c2 = arith.constant 2 : index
    %4 = vector.load %arg5[%c0_4, %c2] : memref<8x256xf32, #tpu.memory_space<vmem>>, vector<4x16xf32>
    tpu.vector_store %arg5[%c0_4, %c2], %3 {strides = array<i32>} : memref<8x256xf32, #tpu.memory_space<vmem>>, vector<4x16xf32>,
    %c0_5 = arith.constant 0 : index
    %c0_6 = arith.constant 0 : index
    %5 = vector.load %arg5[%c0_5, %c0_6] : memref<8x256xf32, #tpu.memory_space<vmem>>, vector<8x128xf32>
    %c0_7 = arith.constant 0 : index
    %c1 = arith.constant 1 : index
    %6 = vector.load %arg5[%c0_7, %c1] : memref<8x256xf32, #tpu.memory_space<vmem>>, vector<8x128xf32>
    %c0_8 = arith.constant 0 : index
    %c2_9 = arith.constant 2 : index
    %7 = vector.load %arg5[%c0_8, %c2_9] : memref<8x256xf32, #tpu.memory_space<vmem>>, vector<8x128xf32>
    %c0_10 = arith.constant 0 : index
    %c3 = arith.constant 3 : index
    %8 = vector.load %arg5[%c0_10, %c3] : memref<8x256xf32, #tpu.memory_space<vmem>>, vector<8x128xf32>
    %c0_11 = arith.constant 0 : index
    %c4 = arith.constant 4 : index
    %9 = vector.load %arg5[%c0_11, %c4] : memref<8x256xf32, #tpu.memory_space<vmem>>, vector<8x128xf32>
    %10 = tpu.concatenate %5, %6, %7, %8, %9 in 0 : vector<8x128xf32>, vector<8x128xf32>, vector<8x128xf32>, vector<8x128xf32>, vector<8x128xf32> -> vector<40x128xf32>
    %c0_12 = arith.constant 0 : index
    %c0_13 = arith.constant 0 : index
    %11 = vector.load %arg2[%c0_12, %c0_13] : memref<16x40xf32, #tpu.memory_space<vmem>>, vector<16x40xf32>
    %cst_14 = arith.constant dense<0.000000e+00> : vector<16x128xf32>
    %12 = tpu.matmul %11, %10, %cst_14 {dimension_numbers = #tpu.dot_dimension_numbers<[1], [0], [0], [1], [0, 0, 1, 1], [], []>} : vector<16x40xf32>, vector<40x128xf32>, vector<16x128xf32> -> vector<16x128xf32>
    %13 = tpu.iota {dimensions = array<i32: 1>} : vector<16x128xi32>
    %c16_i32 = arith.constant 16 : i32
    %14 = vector.broadcast %c16_i32 : i32 to vector<16x128xi32>
    %15 = arith.cmpi slt, %13, %14 : vector<16x128xi32>
    %cst_15 = arith.constant 0.000000e+00 : f32
    %16 = vector.broadcast %cst_15 : f32 to vector<16x128xf32>
    %17 = arith.select %15, %12, %16 : vector<16x128xi1>, vector<16x128xf32>
    %cst_16 = arith.constant dense<0.000000e+00> : vector<16xf32>
    %18 = vector.multi_reduction <add>, %17, %cst_16 [1] : vector<16x128xf32> to vector<16xf32>
    %19 = vector.shape_cast %18 : vector<16xf32> to vector<16x1xf32>
    %20 = arith.mulf %17, %17 : vector<16x128xf32>
    %cst_17 = arith.constant dense<0.000000e+00> : vector<16xf32>
    %21 = vector.multi_reduction <add>, %20, %cst_17 [1] : vector<16x128xf32> to vector<16xf32>
    %22 = vector.shape_cast %21 : vector<16xf32> to vector<16x1xf32>
    %23 = vector.extract_strided_slice %19 {offsets = [0, 0], sizes = [8, 1], strides = [1, 1]} : vector<16x1xf32> to vector<8x1xf32>
    %24 = vector.extract_strided_slice %19 {offsets = [8, 0], sizes = [8, 1], strides = [1, 1]} : vector<16x1xf32> to vector<8x1xf32>
    %25 = arith.addf %23, %24 : vector<8x1xf32>
    %cst_18 = arith.constant 3.125000e-02 : f32
    %26 = vector.broadcast %cst_18 : f32 to vector<8x1xf32>
    %27 = arith.mulf %25, %26 : vector<8x1xf32>
    %28 = vector.extract_strided_slice %22 {offsets = [0, 0], sizes = [8, 1], strides = [1, 1]} : vector<16x1xf32> to vector<8x1xf32>
    %29 = vector.extract_strided_slice %22 {offsets = [8, 0], sizes = [8, 1], strides = [1, 1]} : vector<16x1xf32> to vector<8x1xf32>
    %30 = arith.addf %28, %29 : vector<8x1xf32>
    %cst_19 = arith.constant 3.125000e-02 : f32
    %31 = vector.broadcast %cst_19 : f32 to vector<8x1xf32>
    %32 = arith.mulf %30, %31 : vector<8x1xf32>
    %33 = arith.mulf %27, %27 : vector<8x1xf32>
    %34 = arith.subf %32, %33 : vector<8x1xf32>
    %cst_20 = arith.constant 9.99999974E-6 : f32
    %35 = vector.broadcast %cst_20 : f32 to vector<8x1xf32>
    %36 = arith.addf %34, %35 : vector<8x1xf32>
    %37 = math.rsqrt %36 : vector<8x1xf32>
    %c0_21 = arith.constant 0 : index
    %c0_22 = arith.constant 0 : index
    %38 = vector.load %arg3[%c0_21, %c0_22] : memref<8x2xf32, #tpu.memory_space<vmem>>, vector<8x1xf32>
    %39 = arith.mulf %37, %38 : vector<8x1xf32>
    %c0_23 = arith.constant 0 : index
    %c1_24 = arith.constant 1 : index
    %40 = vector.load %arg3[%c0_23, %c1_24] : memref<8x2xf32, #tpu.memory_space<vmem>>, vector<8x1xf32>
    %41 = arith.mulf %27, %39 : vector<8x1xf32>
    %42 = arith.subf %40, %41 : vector<8x1xf32>
    %43 = vector.extract_strided_slice %17 {offsets = [0, 0], sizes = [8, 128], strides = [1, 1]} : vector<16x128xf32> to vector<8x128xf32>
    %44 = vector.broadcast %39 : vector<8x1xf32> to vector<8x128xf32>
    %45 = arith.mulf %43, %44 : vector<8x128xf32>
    %46 = vector.broadcast %42 : vector<8x1xf32> to vector<8x128xf32>
    %47 = arith.addf %45, %46 : vector<8x128xf32>
    %48 = vector.extract_strided_slice %17 {offsets = [8, 0], sizes = [8, 128], strides = [1, 1]} : vector<16x128xf32> to vector<8x128xf32>
    %49 = vector.broadcast %39 : vector<8x1xf32> to vector<8x128xf32>
    %50 = arith.mulf %48, %49 : vector<8x128xf32>
    %51 = vector.broadcast %42 : vector<8x1xf32> to vector<8x128xf32>
    %52 = arith.addf %50, %51 : vector<8x128xf32>
    %53 = arith.negf %47 : vector<8x128xf32>
    %54 = math.exp %53 : vector<8x128xf32>
    %cst_25 = arith.constant 1.000000e+00 : f32
    %55 = vector.broadcast %cst_25 : f32 to vector<8x128xf32>
    %56 = arith.addf %55, %54 : vector<8x128xf32>
    %57 = arith.divf %55, %56 : vector<8x128xf32>
    %58 = arith.mulf %47, %57 : vector<8x128xf32>
    %59 = arith.negf %52 : vector<8x128xf32>
    %60 = math.exp %59 : vector<8x128xf32>
    %cst_26 = arith.constant 1.000000e+00 : f32
    %61 = vector.broadcast %cst_26 : f32 to vector<8x128xf32>
    %62 = arith.addf %61, %60 : vector<8x128xf32>
    %63 = arith.divf %61, %62 : vector<8x128xf32>
    %64 = arith.mulf %52, %63 : vector<8x128xf32>
    %65 = vector.extract_strided_slice %58 {offsets = [0, 0], sizes = [4, 16], strides = [1, 1]} : vector<8x128xf32> to vector<4x16xf32>
    %c0_27 = arith.constant 0 : index
    %c0_28 = arith.constant 0 : index
    %c0_29 = arith.constant 0 : index
    %66 = vector.load %arg4[%c0_27, %c0_28, %c0_29] : memref<1x4x32xf32, #tpu.memory_space<vmem>>, vector<1x4x16xf32>
    %67 = vector.shape_cast %66 : vector<1x4x16xf32> to vector<4x16xf32>
    %68 = vector.shape_cast %65 : vector<4x16xf32> to vector<1x4x16xf32>
    tpu.vector_store %arg4[%c0_27, %c0_28, %c0_29], %68 {strides = array<i32>} : memref<1x4x32xf32, #tpu.memory_space<vmem>>, vector<1x4x16xf32>,
    %69 = vector.extract_strided_slice %64 {offsets = [0, 0], sizes = [4, 16], strides = [1, 1]} : vector<8x128xf32> to vector<4x16xf32>
    %c0_30 = arith.constant 0 : index
    %c0_31 = arith.constant 0 : index
    %c16 = arith.constant 16 : index
    %70 = vector.load %arg4[%c0_30, %c0_31, %c16] : memref<1x4x32xf32, #tpu.memory_space<vmem>>, vector<1x4x16xf32>
    %71 = vector.shape_cast %70 : vector<1x4x16xf32> to vector<4x16xf32>
    %72 = vector.shape_cast %69 : vector<4x16xf32> to vector<1x4x16xf32>
    tpu.vector_store %arg4[%c0_30, %c0_31, %c16], %72 {strides = array<i32>} : memref<1x4x32xf32, #tpu.memory_space<vmem>>, vector<1x4x16xf32>,
    return
  }
  func.func @transform_0(%arg0: i32) -> (i32, i32, i32) {
    %c0_i32 = arith.constant 0 : i32
    %c0_i32_0 = arith.constant 0 : i32
    %c0_i32_1 = arith.constant 0 : i32
    return %arg0, %c0_i32, %c0_i32_0 : i32, i32, i32
  }
  func.func @transform_1(%arg0: i32) -> (i32, i32) {
    %c0_i32 = arith.constant 0 : i32
    %c0_i32_0 = arith.constant 0 : i32
    %c0_i32_1 = arith.constant 0 : i32
    return %c0_i32, %c0_i32_0 : i32, i32
  }
  func.func @transform_2(%arg0: i32) -> (i32, i32) {
    %c0_i32 = arith.constant 0 : i32
    %c0_i32_0 = arith.constant 0 : i32
    %c0_i32_1 = arith.constant 0 : i32
    return %c0_i32, %c0_i32_0 : i32, i32
  }
  func.func @transform_3(%arg0: i32) -> (i32, i32, i32) {
    %c0_i32 = arith.constant 0 : i32
    %c0_i32_0 = arith.constant 0 : i32
    %c0_i32_1 = arith.constant 0 : i32
    return %arg0, %c0_i32, %c0_i32_0 : i32, i32, i32
  }
}

</mosaic_0001>

<llo_original>
// kernel: tpu_custom_call.1
$region0: #{tpu_custom_call.1}
  #allocation0 [shape = 'u32[]', space=smem, size = 0x4, offset = 0x4, fixed_abs, tag = 'smem constant byte address 0x4 - core index']
  #allocation1 [shape = 'u32[144,128]{1,0:T(1,128)}', space=vmem, size = 0x12000, scoped, tag = 'internal scratch']
  #allocation2 [shape = 'f32[8,256]{1,0:T(8,128)}', space=vmem, size = 0x2000, scoped, tag = 'scratch operand']
  %s0 = inlined_call_operand.vmem [shape: f32[2,4,16], index: 0, kind: input, shape index: {}]
  %s1 = inlined_call_operand.hbm [shape: f32[16,40], index: 1, kind: input, shape index: {}]
  %s2 = inlined_call_operand.vmem [shape: f32[8,2], index: 2, kind: input, shape index: {}]
  %s3 = inlined_call_operand.hbm [shape: f32[2,4,32], index: 3, kind: output, shape index: {}]
  %s4 = sld [smem:[#allocation0]]
  $region49: #{tpu_custom_call.1} parent=0
    _
  %s6 = ssub.s32 1, %s4
  %s7 = scalar_select 0, %s6, %s4
  $region1: #{tpu_custom_call.1} parent=0
    #allocation3 [shape = 'u8[8192]{0}', space=vmem, size = 0x2000, scoped, tag = 'input window, operand 1, single buffered']
    #allocation4 [shape = 's32[2]{0}', space=sflag, size = 0x8, scoped, tag = 'scoped memory for tpu_custom_call.1']
    #allocation5 [shape = 's32[2]{0}', space=sflag, size = 0x8, scoped, tag = 'scoped memory for tpu_custom_call.1']
    #allocation6 [shape = 'u8[4096]{0}', space=vmem, size = 0x1000, scoped, tag = 'output window, operand 0']
    %8 = vsyncpa [#allocation4], 0
    %9 = vsyncpa [#allocation5], 0
    %s10 = scalar_lea.sflag [#allocation5], 1
    %11 = vsyncpa %s10, 0
    loop: start=0, step=1, limit=4
    $region2: #{tpu_custom_call.1} parent=1 // loop_pre_header
      _
    $region3: #{tpu_custom_call.1} parent=1 // loop_header
      %s13 = sphi 0, %s17
      %p14 = scmp.ge.s32.totalorder %s13, 4
      %s23 = sphi 0, %s25
      %s26 = sphi 0, %s23
      %s27 = sphi 0, %s26
      %s43 = sphi 0, %s27
      %s47 = sphi 0, %s47
      %s49 = sphi 0, %s47
      %s50 = sphi 0, %s49
      %s64 = sphi 0, %s50
      %s68 = sphi 0, %s68
      %s70 = sphi 0, %s68
      %s71 = sphi 0, %s70
      %s85 = sphi 0, %s71
      %s91 = sphi 0, %s93
      %s94 = sphi 0, %s91
      %s95 = sphi 0, %s94
      %s111 = sphi 0, %s95
    $region4: #{tpu_custom_call.1} parent=1 // loop_header_branch
      %16 = sbr.rel (%p14) target = $region8
    $region5: #{tpu_custom_call.1} parent=1 // loop_body
      %s18 = ssub.s32 %s13, 1
      %s19 = ssub.s32 %s13, 2
      %s20 = sadd.s32 %s13, 1
      %s21 = ssub.s32 %s13, %s20
      %p22 = scmp.eq.s32.totalorder %s21, 0
      %s24 = sadd.s32 %s23, 1
      %s25 = scalar_select %p22, %s23, %s24
      %p28 = pneg %p22
      %p29 = scmp.eq.s32.totalorder %s13, 1
      %p30 = por %p28, %p29
      %p31 = scmp.ne.s32.totalorder %s23, %s26
      %p32 = scmp.eq.s32.totalorder %s13, 0
      %p33 = por %p31, %p32
      %p34 = scmp.ne.s32.totalorder %s23, %s26
      %p35 = scmp.eq.s32.totalorder %s18, 1
      %p36 = por %p34, %p35
      %p37 = scmp.ne.s32.totalorder %s26, %s27
      %p38 = scmp.eq.s32.totalorder %s18, 0
      %p39 = por %p37, %p38
      %p40 = scmp.ne.s32.totalorder %s26, %s27
      %p41 = scmp.eq.s32.totalorder %s19, 1
      %p42 = por %p40, %p41
      %p44 = scmp.ne.s32.totalorder %s27, %s43
      %p45 = scmp.eq.s32.totalorder %s19, 0
      %p46 = por %p44, %p45
      %s48 = sadd.s32 %s47, 1
      %p51 = scmp.eq.s32.totalorder %s13, 1
      %p52 = scmp.ne.s32.totalorder %s47, %s49
      %p53 = scmp.eq.s32.totalorder %s13, 0
      %p54 = por %p52, %p53
      %p55 = scmp.ne.s32.totalorder %s47, %s49
      %p56 = scmp.eq.s32.totalorder %s18, 1
      %p57 = por %p55, %p56
      %p58 = scmp.ne.s32.totalorder %s49, %s50
      %p59 = scmp.eq.s32.totalorder %s18, 0
      %p60 = por %p58, %p59
      %p61 = scmp.ne.s32.totalorder %s49, %s50
      %p62 = scmp.eq.s32.totalorder %s19, 1
      %p63 = por %p61, %p62
      %p65 = scmp.ne.s32.totalorder %s50, %s64
      %p66 = scmp.eq.s32.totalorder %s19, 0
      %p67 = por %p65, %p66
      %s69 = sadd.s32 %s68, 1
      %p72 = scmp.eq.s32.totalorder %s13, 1
      %p73 = scmp.ne.s32.totalorder %s68, %s70
      %p74 = scmp.eq.s32.totalorder %s13, 0
      %p75 = por %p73, %p74
      %p76 = scmp.ne.s32.totalorder %s68, %s70
      %p77 = scmp.eq.s32.totalorder %s18, 1
      %p78 = por %p76, %p77
      %p79 = scmp.ne.s32.totalorder %s70, %s71
      %p80 = scmp.eq.s32.totalorder %s18, 0
      %p81 = por %p79, %p80
      %p82 = scmp.ne.s32.totalorder %s70, %s71
      %p83 = scmp.eq.s32.totalorder %s19, 1
      %p84 = por %p82, %p83
      %p86 = scmp.ne.s32.totalorder %s71, %s85
      %p87 = scmp.eq.s32.totalorder %s19, 0
      %p88 = por %p86, %p87
      %s89 = ssub.s32 %s13, %s20
      %p90 = scmp.eq.s32.totalorder %s89, 0
      %s92 = sadd.s32 %s91, 1
      %s93 = scalar_select %p90, %s91, %s92
      %p96 = pneg %p90
      %p97 = scmp.eq.s32.totalorder %s13, 1
      %p98 = por %p96, %p97
      %p99 = scmp.ne.s32.totalorder %s91, %s94
      %p100 = scmp.eq.s32.totalorder %s13, 0
      %p101 = por %p99, %p100
      %p102 = scmp.ne.s32.totalorder %s91, %s94
      %p103 = scmp.eq.s32.totalorder %s18, 1
      %p104 = por %p102, %p103
      %p105 = scmp.ne.s32.totalorder %s94, %s95
      %p106 = scmp.eq.s32.totalorder %s18, 0
      %p107 = por %p105, %p106
      %p108 = scmp.ne.s32.totalorder %s94, %s95
      %p109 = scmp.eq.s32.totalorder %s19, 1
      %p110 = por %p108, %p109
      %p112 = scmp.ne.s32.totalorder %s95, %s111
      %p113 = scmp.eq.s32.totalorder %s19, 0
      %p114 = por %p112, %p113
      %p115 = scmp.le.s32.totalorder 1, %s13
      %p116 = scmp.lt.s32.totalorder %s13, 3
      %p117 = pnand %p115, %p116
      %p118 = pneg %p117
      // Predicated region
      $region9: #{tpu_custom_call.1} parent=5 // pred_check
        _
      $region10: #{tpu_custom_call.1} parent=5 // pred_check_branch
        %120 = sbr.rel (%p117) target = $region12
      $region11: #{tpu_custom_call.1} parent=5 // pred_region
        %s121 = ssub.s32 %s13, 1
        // Predicated region
        $region13: #{tpu_custom_call.1} parent=11 // pred_check
          %p122 = pneg %p60
        $region14: #{tpu_custom_call.1} parent=11 // pred_check_branch
          %124 = sbr.rel (%p122) target = $region16
        $region15: #{tpu_custom_call.1} parent=11 // pred_region
          %s126 = ssub.s32 256, 256
          %127 = vsyncadd [#allocation4], %s126
          %s128 = sshll.u32 [#allocation3], 4
          %s129 = int_to_ptr.vmem [resolvable:$true] %s128
          %134 = dma.hbm_to_vmem [thread:$0]  %s1, 256, %s129, [#allocation4], 128, 128, 8
        $region16: #{tpu_custom_call.1} parent=11 // pred_fallthru
          _
        // Predicated region
        $region17: #{tpu_custom_call.1} parent=11 // pred_check
          %p135 = pneg %p81
        $region18: #{tpu_custom_call.1} parent=11 // pred_check_branch
          %137 = sbr.rel (%p135) target = $region20
        $region19: #{tpu_custom_call.1} parent=11 // pred_region
          _
        $region20: #{tpu_custom_call.1} parent=11 // pred_fallthru
          _
      $region12: #{tpu_custom_call.1} parent=5 // pred_fallthru
        _
      %p138 = scmp.lt.s32.totalorder %s13, 2
      // Predicated region
      $region21: #{tpu_custom_call.1} parent=5 // pred_check
        %p139 = pneg %p138
      $region22: #{tpu_custom_call.1} parent=5 // pred_check_branch
        %141 = sbr.rel (%p139) target = $region24
      $region23: #{tpu_custom_call.1} parent=5 // pred_region
        // Predicated region
        $region25: #{tpu_custom_call.1} parent=23 // pred_check
          %p142 = pneg %p33
        $region26: #{tpu_custom_call.1} parent=23 // pred_check_branch
          %144 = sbr.rel (%p142) target = $region28
        $region27: #{tpu_custom_call.1} parent=23 // pred_region
          %p145 = scmp.lt.s32.totalorder %s13, 1
          %s146 = scalar_select %p145, %s13, 1
          %s147 = smul.addr %s146, 4
          %s148 = scalar_lea.vmem %s0, %s147
        $region28: #{tpu_custom_call.1} parent=23 // pred_fallthru
          _
      $region24: #{tpu_custom_call.1} parent=5 // pred_fallthru
        _
      %p149 = scmp.le.s32.totalorder 1, %s13
      %p150 = scmp.lt.s32.totalorder %s13, 3
      %p151 = pnand %p149, %p150
      %p152 = pneg %p151
      // Predicated region
      $region29: #{tpu_custom_call.1} parent=5 // pred_check
        _
      $region30: #{tpu_custom_call.1} parent=5 // pred_check_branch
        %154 = sbr.rel (%p151) target = $region32
      $region31: #{tpu_custom_call.1} parent=5 // pred_region
        %s155 = ssub.s32 %s13, 1
        // Predicated region
        $region33: #{tpu_custom_call.1} parent=31 // pred_check
          %p156 = pneg %p60
        $region34: #{tpu_custom_call.1} parent=31 // pred_check_branch
          %158 = sbr.rel (%p156) target = $region36
        $region35: #{tpu_custom_call.1} parent=31 // pred_region
          %159 = dma.done [#allocation4], 256
        $region36: #{tpu_custom_call.1} parent=31 // pred_fallthru
          _
        %p160 = scmp.lt.s32.totalorder %s18, 1
        %s161 = scalar_select %p160, %s18, 1
        %s162 = smul.addr %s161, 4
        %s163 = scalar_lea.vmem %s0, %s162
        %p164 = pneg %p39
        %p165 = pneg %p36
        %p166 = pneg %p60
        %p167 = pneg %p57
        %p168 = pneg %p81
        %p169 = pneg %p78
        %p170 = pneg %p107
        %p171 = pneg %p104
        %s172 = sand.u32 %s94, 1
        %s173 = scalar_lea.sflag [#allocation5], %s172
        %s174 = sand.u32 %s94, 1
        %s175 = smul.addr %s174, 4
        %s176 = scalar_lea.vmem [#allocation6], %s175
        %p177 = scmp.lt.s32.totalorder %s18, 1
        %s178 = scalar_select %p177, %s18, 1
        %s179 = smul.addr %s178, 4
        %s180 = scalar_lea.vmem %s0, %s179
        %181 = vst [vmem:[#allocation2] sm:$0xff] 0.0
        %182 = vst [vmem:[#allocation2 + $0x8] sm:$0xff] 0.0
        %v183 = vld [vmem:[%s180] sm:$0xf]
        %185 = vrot.lane.b32.xlu0 %v183, 2
        %v186 = vpop.permute.xlu0 %185
        %vm188 = vcmask 142352
        %189 = vst.msk [vmem:[#allocation2] sm:$0xf] %vm188, %v186
        %v190 = vld [vmem:[#allocation2] sm:$0xff]
        %v191 = vld [vmem:[#allocation2] sm:$0xff]
        %v192 = vld [vmem:[#allocation2 + $0x8] sm:$0xff]
        %195 = vrot.lane.b32.xlu0 %v191, 127
        %v196 = vpop.permute.xlu0 %195
        %197 = vrot.lane.b32.xlu0 %v192, 127
        %v198 = vpop.permute.xlu0 %197
        %vm199 = vcmask 1039360
        %v200 = vsel %vm199, %v196, %v198
        %202 = vrot.lane.b32.xlu0 %v191, 126
        %v203 = vpop.permute.xlu0 %202
        %204 = vrot.lane.b32.xlu0 %v192, 126
        %v205 = vpop.permute.xlu0 %204
        %vm206 = vcmask 1031168
        %v207 = vsel %vm206, %v203, %v205
        %209 = vrot.lane.b32.xlu0 %v191, 125
        %v210 = vpop.permute.xlu0 %209
        %211 = vrot.lane.b32.xlu0 %v192, 125
        %v212 = vpop.permute.xlu0 %211
        %vm213 = vcmask 1022976
        %v214 = vsel %vm213, %v210, %v212
        %216 = vrot.lane.b32.xlu0 %v191, 124
        %v217 = vpop.permute.xlu0 %216
        %218 = vrot.lane.b32.xlu0 %v192, 124
        %v219 = vpop.permute.xlu0 %218
        %vm220 = vcmask 1014784
        %v221 = vsel %vm220, %v217, %v219
        %v223 = vld [vmem:[#allocation3] sm:$0xff]
        %v224 = vld [vmem:[#allocation3 + $0x8] sm:$0xff]
        %vm225 = vcmask 326656
        %v227 = vsel %vm225, %v223, 0
        %v230 = vsel %vm225, %v224, 0
        %232 = vmatprep.subr.mxu0 0.0
        %233 = vmatpush1.msra.mxu0 %v190
        %234 = vmatprep.subr.mxu0 0.0
        %235 = vmatpush1.msra.mxu0 %v200
        %236 = vmatprep.subr.mxu0 0.0
        %237 = vmatpush1.msra.mxu0 %v207
        %238 = vmatprep.subr.mxu0 0.0
        %239 = vmatpush1.msra.mxu0 %v214
        %240 = vmatprep.subr.mxu0 0.0
        %241 = vmatpush1.msra.mxu0 %v221
        %242 = vmatprep.subr.mxu0 0.0
        %243 = vmatpush1.msra.mxu0 0.0
        %244 = vmatprep.subr.mxu0 0.0
        %245 = vmatpush1.msra.mxu0 0.0
        %246 = vmatprep.subr.mxu0 0.0
        %247 = vmatpush1.msra.mxu0 0.0
        %248 = vmatprep.subr.mxu0 0.0
        %249 = vmatpush1.msra.mxu0 0.0
        %250 = vmatprep.subr.mxu0 0.0
        %251 = vmatpush1.msra.mxu0 0.0
        %252 = vmatprep.subr.mxu0 0.0
        %253 = vmatpush1.msra.mxu0 0.0
        %254 = vmatprep.subr.mxu0 0.0
        %255 = vmatpush1.msra.mxu0 0.0
        %256 = vmatprep.subr.mxu0 0.0
        %257 = vmatpush1.msra.mxu0 0.0
        %258 = vmatprep.subr.mxu0 0.0
        %259 = vmatpush1.msra.mxu0 0.0
        %260 = vmatprep.subr.mxu0 0.0
        %261 = vmatpush1.msra.mxu0 0.0
        %262 = vmatprep.subr.mxu0 0.0
        %263 = vmatpush1.msra.mxu0 0.0
        %264 = vmatprep.subr.mxu0 0.0
        %265 = vmatpush1.msra.mxu0 0.0
        %266 = vmatprep.subr.mxu0 0.0
        %267 = vmatpush1.msra.mxu0 0.0
        %268 = vmatprep.subr.mxu0 0.0
        %269 = vmatpush1.msra.mxu0 0.0
        %270 = vmatprep.subr.mxu0 0.0
        %271 = vmatpush1.msra.mxu0 0.0
        %272 = vmatprep.subr.mxu0 0.0
        %273 = vmatpush1.msra.mxu0 0.0
        %274 = vmatprep.subr.mxu0 0.0
        %275 = vmatpush1.msra.mxu0 0.0
        %276 = vmatprep.subr.mxu0 0.0
        %277 = vmatpush1.msra.mxu0 0.0
        %278 = vmatprep.subr.mxu0 0.0
        %279 = vmatpush1.msra.mxu0 0.0
        %280 = vmatprep.subr.mxu0 0.0
        %281 = vmatpush1.msra.mxu0 0.0
        %282 = vmatprep.subr.mxu0 0.0
        %283 = vmatpush1.msra.mxu0 0.0
        %284 = vmatprep.subr.mxu0 0.0
        %285 = vmatpush1.msra.mxu0 0.0
        %286 = vmatprep.subr.mxu0 0.0
        %287 = vmatpush1.msra.mxu0 0.0
        %288 = vmatprep.subr.mxu0 0.0
        %289 = vmatpush1.msra.mxu0 0.0
        %290 = vmatprep.subr.mxu0 0.0
        %291 = vmatpush1.msra.mxu0 0.0
        %292 = vmatprep.subr.mxu0 0.0
        %293 = vmatpush1.msra.mxu0 0.0
        %294 = vmatprep.subr.mxu0 0.0
        %295 = vmatpush1.msra.mxu0 0.0
        %296 = vmatprep.mubr.f32.mxu0 0.0
        %297 = vmatmul.mubr.f32.gmra.mrb[0].mxu0 %v227
        %v298 = vpop.f32.mrb[0].mxu0
        %v299 = vadd.f32 0.0, %v298
        %v300 = vpop.f32.mrb[0].mxu0
        %301 = vmatprep.mubr.f32.mxu0 0.0
        %302 = vmatmul.mubr.f32.gmra.mrb[0].mxu0 %v230
        %v303 = vpop.f32.mrb[0].mxu0
        %v304 = vadd.f32 0.0, %v303
        %v305 = vpop.f32.mrb[0].mxu0
        %306 = vdwg.mxu0
        %v307 = vlaneseq
        %v308 = vand.u32 %v307, 127
        %vm309 = vcmp.lt.s32.totalorder %v308, 16
        %v310 = vsel %vm309, %v299, 0.0
        %v311 = vsel %vm309, %v304, 0.0
        %312 = vadd.xlane.f32.xlu0 %v310
        %v313 = vpop.xlane.xlu0 %312
        %314 = vadd.xlane.f32.xlu0 %v311
        %v315 = vpop.xlane.xlu0 %314
        %v316 = vmul.f32 %v310, %v310
        %v317 = vmul.f32 %v311, %v311
        %318 = vadd.xlane.f32.xlu0 %v316
        %v319 = vpop.xlane.xlu0 %318
        %320 = vadd.xlane.f32.xlu0 %v317
        %v321 = vpop.xlane.xlu0 %320
        %v322 = vadd.f32 %v313, %v315
        %v323 = vmul.f32 %v322, 0.03125
        %v324 = vadd.f32 %v319, %v321
        %v325 = vmul.f32 %v324, 0.03125
        %v326 = vmul.f32 %v323, %v323
        %v327 = vsub.f32 %v325, %v326
        %v328 = vadd.f32 %v327, 1e-05
        %v329 = vrsqrt.pop %v328
        %v330 = vld [vmem:[%s2] sm:$0xff]
        %v331 = vmul.f32 %v329, %v330
        %v332 = vmul.f32 %v323, %v331
        %334 = vrot.lane.b32.xlu0 %v332, 1
        %v335 = vpop.permute.xlu0 %334
        %v337 = vsub.f32 %v330, %v335
        %339 = vset.pattern.permute.xlu0 0
        %340 = vperm.xlu0 %339, %v331
        %v341 = vpop.permute.xlu0 %340
        %v343 = vmul.f32 %v310, %v341
        %345 = vset.pattern.permute.xlu0 1
        %346 = vperm.xlu0 %345, %v337
        %v347 = vpop.permute.xlu0 %346
        %v349 = vadd.f32 %v343, %v347
        %v350 = vmul.f32 %v311, %v341
        %v351 = vadd.f32 %v350, %v347
        %v352 = vxor.u32 %v349, 2147483648
        %v353 = vmul.f32 %v352, 1.442695
        %v354 = vpow.pop %v353
        %v355 = vadd.f32 %v354, 1.0
        %v356 = vrcp.pop %v355
        %v357 = vmul.f32 1.0, %v356
        %v358 = vmul.f32 %v349, %v357
        %v359 = vxor.u32 %v351, 2147483648
        %v360 = vmul.f32 %v359, 1.442695
        %v361 = vpow.pop %v360
        %v362 = vadd.f32 %v361, 1.0
        %v363 = vrcp.pop %v362
        %v364 = vmul.f32 1.0, %v363
        %v365 = vmul.f32 %v351, %v364
        %vm366 = vcmask 125952
        %367 = vst.msk [vmem:[%s176] sm:$0xf] %vm366, %v358
        %369 = vrot.lane.b32.xlu0 %v365, 16
        %v370 = vpop.permute.xlu0 %369
        %vm372 = vcmask 257152
        %373 = vst.msk [vmem:[%s176] sm:$0xf] %vm372, %v370
        %s374 = sand.u32 %s94, 1
        %s375 = scalar_lea.sflag [#allocation5], %s374
        %s376 = sand.u32 %s94, 1
        %s377 = smul.addr %s376, 4
        %s378 = scalar_lea.vmem [#allocation6], %s377
        // Predicated region
        $region37: #{tpu_custom_call.1} parent=31 // pred_check
          %p379 = pneg %p104
        $region38: #{tpu_custom_call.1} parent=31 // pred_check_branch
          %381 = sbr.rel (%p379) target = $region40
        $region39: #{tpu_custom_call.1} parent=31 // pred_region
          %s383 = ssub.s32 64, 64
          %384 = vsyncadd %s375, %s383
          %s385 = smul.addr %s18, 64
          %s386 = scalar_lea.hbm %s3, %s385
          %s388 = sshll.u32 %s378, 4
          %s389 = int_to_ptr.vmem [resolvable:$true] %s388
          %391 = dma.vmem_to_hbm [thread:$0]  %s389, 64, %s386, %s375
        $region40: #{tpu_custom_call.1} parent=31 // pred_fallthru
          _
      $region32: #{tpu_custom_call.1} parent=5 // pred_fallthru
        _
      %p392 = scmp.le.s32.totalorder 2, %s13
      // Predicated region
      $region41: #{tpu_custom_call.1} parent=5 // pred_check
        %p393 = pneg %p392
      $region42: #{tpu_custom_call.1} parent=5 // pred_check_branch
        %395 = sbr.rel (%p393) target = $region44
      $region43: #{tpu_custom_call.1} parent=5 // pred_region
        %s396 = ssub.s32 %s13, 2
        // Predicated region
        $region45: #{tpu_custom_call.1} parent=43 // pred_check
          %p397 = pneg %p110
        $region46: #{tpu_custom_call.1} parent=43 // pred_check_branch
          %399 = sbr.rel (%p397) target = $region48
        $region47: #{tpu_custom_call.1} parent=43 // pred_region
          %s400 = sand.u32 %s95, 1
          %s401 = scalar_lea.sflag [#allocation5], %s400
          %s402 = sand.u32 %s95, 1
          %s403 = smul.addr %s402, 4
          %s404 = scalar_lea.vmem [#allocation6], %s403
          %405 = dma.done %s401, 64
        $region48: #{tpu_custom_call.1} parent=43 // pred_fallthru
          _
      $region44: #{tpu_custom_call.1} parent=5 // pred_fallthru
        _
    $region6: #{tpu_custom_call.1} parent=1 // loop_footer
      %s17 = sadd.s32 1, %s13
    $region7: #{tpu_custom_call.1} parent=1 // loop_footer_branch
      %12 = sbr.rel target = $region3
    $region8: #{tpu_custom_call.1} parent=1 // loop_exit
      _
    %406 = vsyncpa [#allocation4], 1
    %s407 = scalar_lea.sflag [#allocation4], 1
    %408 = vsyncpa %s407, 1
    %409 = vsyncpa [#allocation5], 1
    %s410 = scalar_lea.sflag [#allocation5], 1
    %411 = vsyncpa %s410, 1

// kernel: tpu_custom_call.1
$region0: #{tpu_custom_call.1}
  #allocation0 [shape = 'u32[]', space=smem, size = 0x4, offset = 0x4, fixed_abs, tag = 'smem constant byte address 0x4 - core index']
  #allocation1 [shape = 'u32[144,128]{1,0:T(1,128)}', space=vmem, size = 0x12000, scoped, tag = 'internal scratch']
  #allocation2 [shape = 'f32[8,256]{1,0:T(8,128)}', space=vmem, size = 0x2000, scoped, tag = 'scratch operand']
  %s0 = inlined_call_operand.vmem [shape: f32[2,4,16], index: 0, kind: input, shape index: {}]
  %s1 = inlined_call_operand.hbm [shape: f32[16,40], index: 1, kind: input, shape index: {}]
  %s2 = inlined_call_operand.vmem [shape: f32[8,2], index: 2, kind: input, shape index: {}]
  %s3 = inlined_call_operand.hbm [shape: f32[2,4,32], index: 3, kind: output, shape index: {}]
  %s4 = sld [smem:[#allocation0]]
  $region49: #{tpu_custom_call.1} parent=0
    _
  %s6 = ssub.s32 1, %s4
  %s7 = scalar_select 0, %s6, %s4
  $region1: #{tpu_custom_call.1} parent=0
    #allocation3 [shape = 'u8[8192]{0}', space=vmem, size = 0x2000, scoped, tag = 'input window, operand 1, single buffered']
    #allocation4 [shape = 's32[2]{0}', space=sflag, size = 0x8, scoped, tag = 'scoped memory for tpu_custom_call.1']
    #allocation5 [shape = 's32[2]{0}', space=sflag, size = 0x8, scoped, tag = 'scoped memory for tpu_custom_call.1']
    #allocation6 [shape = 'u8[4096]{0}', space=vmem, size = 0x1000, scoped, tag = 'output window, operand 0']
    %8 = vsyncpa [#allocation4], 0
    %9 = vsyncpa [#allocation5], 0
    %s10 = scalar_lea.sflag [#allocation5], 1
    %11 = vsyncpa %s10, 0
    loop: start=0, step=1, limit=4
    $region2: #{tpu_custom_call.1} parent=1 // loop_pre_header
      _
    $region3: #{tpu_custom_call.1} parent=1 // loop_header
      %s13 = sphi 0, %s17
      %p14 = scmp.ge.s32.totalorder %s13, 4
      %s23 = sphi 0, %s25
      %s26 = sphi 0, %s23
      %s27 = sphi 0, %s26
      %s43 = sphi 0, %s27
      %s47 = sphi 0, %s47
      %s49 = sphi 0, %s47
      %s50 = sphi 0, %s49
      %s64 = sphi 0, %s50
      %s68 = sphi 0, %s68
      %s70 = sphi 0, %s68
      %s71 = sphi 0, %s70
      %s85 = sphi 0, %s71
      %s91 = sphi 0, %s93
      %s94 = sphi 0, %s91
      %s95 = sphi 0, %s94
      %s111 = sphi 0, %s95
    $region4: #{tpu_custom_call.1} parent=1 // loop_header_branch
      %16 = sbr.rel (%p14) target = $region8
    $region5: #{tpu_custom_call.1} parent=1 // loop_body
      %s18 = ssub.s32 %s13, 1
      %s19 = ssub.s32 %s13, 2
      %s20 = sadd.s32 %s13, 1
      %s21 = ssub.s32 %s13, %s20
      %p22 = scmp.eq.s32.totalorder %s21, 0
      %s24 = sadd.s32 %s23, 1
      %s25 = scalar_select %p22, %s23, %s24
      %p28 = pneg %p22
      %p29 = scmp.eq.s32.totalorder %s13, 1
      %p30 = por %p28, %p29
      %p31 = scmp.ne.s32.totalorder %s23, %s26
      %p32 = scmp.eq.s32.totalorder %s13, 0
      %p33 = por %p31, %p32
      %p34 = scmp.ne.s32.totalorder %s23, %s26
      %p35 = scmp.eq.s32.totalorder %s18, 1
      %p36 = por %p34, %p35
      %p37 = scmp.ne.s32.totalorder %s26, %s27
      %p38 = scmp.eq.s32.totalorder %s18, 0
      %p39 = por %p37, %p38
      %p40 = scmp.ne.s32.totalorder %s26, %s27
      %p41 = scmp.eq.s32.totalorder %s19, 1
      %p42 = por %p40, %p41
      %p44 = scmp.ne.s32.totalorder %s27, %s43
      %p45 = scmp.eq.s32.totalorder %s19, 0
      %p46 = por %p44, %p45
      %s48 = sadd.s32 %s47, 1
      %p51 = scmp.eq.s32.totalorder %s13, 1
      %p52 = scmp.ne.s32.totalorder %s47, %s49
      %p53 = scmp.eq.s32.totalorder %s13, 0
      %p54 = por %p52, %p53
      %p55 = scmp.ne.s32.totalorder %s47, %s49
      %p56 = scmp.eq.s32.totalorder %s18, 1
      %p57 = por %p55, %p56
      %p58 = scmp.ne.s32.totalorder %s49, %s50
      %p59 = scmp.eq.s32.totalorder %s18, 0
      %p60 = por %p58, %p59
      %p61 = scmp.ne.s32.totalorder %s49, %s50
      %p62 = scmp.eq.s32.totalorder %s19, 1
      %p63 = por %p61, %p62
      %p65 = scmp.ne.s32.totalorder %s50, %s64
      %p66 = scmp.eq.s32.totalorder %s19, 0
      %p67 = por %p65, %p66
      %s69 = sadd.s32 %s68, 1
      %p72 = scmp.eq.s32.totalorder %s13, 1
      %p73 = scmp.ne.s32.totalorder %s68, %s70
      %p74 = scmp.eq.s32.totalorder %s13, 0
      %p75 = por %p73, %p74
      %p76 = scmp.ne.s32.totalorder %s68, %s70
      %p77 = scmp.eq.s32.totalorder %s18, 1
      %p78 = por %p76, %p77
      %p79 = scmp.ne.s32.totalorder %s70, %s71
      %p80 = scmp.eq.s32.totalorder %s18, 0
      %p81 = por %p79, %p80
      %p82 = scmp.ne.s32.totalorder %s70, %s71
      %p83 = scmp.eq.s32.totalorder %s19, 1
      %p84 = por %p82, %p83
      %p86 = scmp.ne.s32.totalorder %s71, %s85
      %p87 = scmp.eq.s32.totalorder %s19, 0
      %p88 = por %p86, %p87
      %s89 = ssub.s32 %s13, %s20
      %p90 = scmp.eq.s32.totalorder %s89, 0
      %s92 = sadd.s32 %s91, 1
      %s93 = scalar_select %p90, %s91, %s92
      %p96 = pneg %p90
      %p97 = scmp.eq.s32.totalorder %s13, 1
      %p98 = por %p96, %p97
      %p99 = scmp.ne.s32.totalorder %s91, %s94
      %p100 = scmp.eq.s32.totalorder %s13, 0
      %p101 = por %p99, %p100
      %p102 = scmp.ne.s32.totalorder %s91, %s94
      %p103 = scmp.eq.s32.totalorder %s18, 1
      %p104 = por %p102, %p103
      %p105 = scmp.ne.s32.totalorder %s94, %s95
      %p106 = scmp.eq.s32.totalorder %s18, 0
      %p107 = por %p105, %p106
      %p108 = scmp.ne.s32.totalorder %s94, %s95
      %p109 = scmp.eq.s32.totalorder %s19, 1
      %p110 = por %p108, %p109
      %p112 = scmp.ne.s32.totalorder %s95, %s111
      %p113 = scmp.eq.s32.totalorder %s19, 0
      %p114 = por %p112, %p113
      %p115 = scmp.le.s32.totalorder 1, %s13
      %p116 = scmp.lt.s32.totalorder %s13, 3
      %p117 = pnand %p115, %p116
      %p118 = pneg %p117
      // Predicated region
      $region9: #{tpu_custom_call.1} parent=5 // pred_check
        _
      $region10: #{tpu_custom_call.1} parent=5 // pred_check_branch
        %120 = sbr.rel (%p117) target = $region12
      $region11: #{tpu_custom_call.1} parent=5 // pred_region
        %s121 = ssub.s32 %s13, 1
        // Predicated region
        $region13: #{tpu_custom_call.1} parent=11 // pred_check
          %p122 = pneg %p60
        $region14: #{tpu_custom_call.1} parent=11 // pred_check_branch
          %124 = sbr.rel (%p122) target = $region16
        $region15: #{tpu_custom_call.1} parent=11 // pred_region
          %s126 = ssub.s32 256, 256
          %127 = vsyncadd [#allocation4], %s126
          %s128 = sshll.u32 [#allocation3], 4
          %s129 = int_to_ptr.vmem [resolvable:$true] %s128
          %134 = dma.hbm_to_vmem [thread:$0]  %s1, 256, %s129, [#allocation4], 128, 128, 8
        $region16: #{tpu_custom_call.1} parent=11 // pred_fallthru
          _
        // Predicated region
        $region17: #{tpu_custom_call.1} parent=11 // pred_check
          %p135 = pneg %p81
        $region18: #{tpu_custom_call.1} parent=11 // pred_check_branch
          %137 = sbr.rel (%p135) target = $region20
        $region19: #{tpu_custom_call.1} parent=11 // pred_region
          _
        $region20: #{tpu_custom_call.1} parent=11 // pred_fallthru
          _
      $region12: #{tpu_custom_call.1} parent=5 // pred_fallthru
        _
      %p138 = scmp.lt.s32.totalorder %s13, 2
      // Predicated region
      $region21: #{tpu_custom_call.1} parent=5 // pred_check
        %p139 = pneg %p138
      $region22: #{tpu_custom_call.1} parent=5 // pred_check_branch
        %141 = sbr.rel (%p139) target = $region24
      $region23: #{tpu_custom_call.1} parent=5 // pred_region
        // Predicated region
        $region25: #{tpu_custom_call.1} parent=23 // pred_check
          %p142 = pneg %p33
        $region26: #{tpu_custom_call.1} parent=23 // pred_check_branch
          %144 = sbr.rel (%p142) target = $region28
        $region27: #{tpu_custom_call.1} parent=23 // pred_region
          %p145 = scmp.lt.s32.totalorder %s13, 1
          %s146 = scalar_select %p145, %s13, 1
          %s147 = smul.addr %s146, 4
          %s148 = scalar_lea.vmem %s0, %s147
        $region28: #{tpu_custom_call.1} parent=23 // pred_fallthru
          _
      $region24: #{tpu_custom_call.1} parent=5 // pred_fallthru
        _
      %p149 = scmp.le.s32.totalorder 1, %s13
      %p150 = scmp.lt.s32.totalorder %s13, 3
      %p151 = pnand %p149, %p150
      %p152 = pneg %p151
      // Predicated region
      $region29: #{tpu_custom_call.1} parent=5 // pred_check
        _
      $region30: #{tpu_custom_call.1} parent=5 // pred_check_branch
        %154 = sbr.rel (%p151) target = $region32
      $region31: #{tpu_custom_call.1} parent=5 // pred_region
        %s155 = ssub.s32 %s13, 1
        // Predicated region
        $region33: #{tpu_custom_call.1} parent=31 // pred_check
          %p156 = pneg %p60
        $region34: #{tpu_custom_call.1} parent=31 // pred_check_branch
          %158 = sbr.rel (%p156) target = $region36
        $region35: #{tpu_custom_call.1} parent=31 // pred_region
          %159 = dma.done [#allocation4], 256
        $region36: #{tpu_custom_call.1} parent=31 // pred_fallthru
          _
        %p160 = scmp.lt.s32.totalorder %s18, 1
        %s161 = scalar_select %p160, %s18, 1
        %s162 = smul.addr %s161, 4
        %s163 = scalar_lea.vmem %s0, %s162
        %p164 = pneg %p39
        %p165 = pneg %p36
        %p166 = pneg %p60
        %p167 = pneg %p57
        %p168 = pneg %p81
        %p169 = pneg %p78
        %p170 = pneg %p107
        %p171 = pneg %p104
        %s172 = sand.u32 %s94, 1
        %s173 = scalar_lea.sflag [#allocation5], %s172
        %s174 = sand.u32 %s94, 1
        %s175 = smul.addr %s174, 4
        %s176 = scalar_lea.vmem [#allocation6], %s175
        %p177 = scmp.lt.s32.totalorder %s18, 1
        %s178 = scalar_select %p177, %s18, 1
        %s179 = smul.addr %s178, 4
        %s180 = scalar_lea.vmem %s0, %s179
        %181 = vst [vmem:[#allocation2] sm:$0xff] 0.0
        %182 = vst [vmem:[#allocation2 + $0x8] sm:$0xff] 0.0
        %v183 = vld [vmem:[%s180] sm:$0xf]
        %185 = vrot.lane.b32.xlu0 %v183, 2
        %v186 = vpop.permute.xlu0 %185
        %vm188 = vcmask 142352
        %189 = vst.msk [vmem:[#allocation2] sm:$0xf] %vm188, %v186
        %v190 = vld [vmem:[#allocation2] sm:$0xff]
        %v191 = vld [vmem:[#allocation2] sm:$0xff]
        %v192 = vld [vmem:[#allocation2 + $0x8] sm:$0xff]
        %195 = vrot.lane.b32.xlu0 %v191, 127
        %v196 = vpop.permute.xlu0 %195
        %197 = vrot.lane.b32.xlu0 %v192, 127
        %v198 = vpop.permute.xlu0 %197
        %vm199 = vcmask 1039360
        %v200 = vsel %vm199, %v196, %v198
        %202 = vrot.lane.b32.xlu0 %v191, 126
        %v203 = vpop.permute.xlu0 %202
        %204 = vrot.lane.b32.xlu0 %v192, 126
        %v205 = vpop.permute.xlu0 %204
        %vm206 = vcmask 1031168
        %v207 = vsel %vm206, %v203, %v205
        %209 = vrot.lane.b32.xlu0 %v191, 125
        %v210 = vpop.permute.xlu0 %209
        %211 = vrot.lane.b32.xlu0 %v192, 125
        %v212 = vpop.permute.xlu0 %211
        %vm213 = vcmask 1022976
        %v214 = vsel %vm213, %v210, %v212
        %216 = vrot.lane.b32.xlu0 %v191, 124
        %v217 = vpop.permute.xlu0 %216
        %218 = vrot.lane.b32.xlu0 %v192, 124
        %v219 = vpop.permute.xlu0 %218
        %vm220 = vcmask 1014784
        %v221 = vsel %vm220, %v217, %v219
        %v223 = vld [vmem:[#allocation3] sm:$0xff]
        %v224 = vld [vmem:[#allocation3 + $0x8] sm:$0xff]
        %vm225 = vcmask 326656
        %v227 = vsel %vm225, %v223, 0
        %v230 = vsel %vm225, %v224, 0
        %232 = vmatprep.subr.mxu0 0.0
        %233 = vmatpush1.msra.mxu0 %v190
        %234 = vmatprep.subr.mxu0 0.0
        %235 = vmatpush1.msra.mxu0 %v200
        %236 = vmatprep.subr.mxu0 0.0
        %237 = vmatpush1.msra.mxu0 %v207
        %238 = vmatprep.subr.mxu0 0.0
        %239 = vmatpush1.msra.mxu0 %v214
        %240 = vmatprep.subr.mxu0 0.0
        %241 = vmatpush1.msra.mxu0 %v221
        %242 = vmatprep.subr.mxu0 0.0
        %243 = vmatpush1.msra.mxu0 0.0
        %244 = vmatprep.subr.mxu0 0.0
        %245 = vmatpush1.msra.mxu0 0.0
        %246 = vmatprep.subr.mxu0 0.0
        %247 = vmatpush1.msra.mxu0 0.0
        %248 = vmatprep.subr.mxu0 0.0
        %249 = vmatpush1.msra.mxu0 0.0
        %250 = vmatprep.subr.mxu0 0.0
        %251 = vmatpush1.msra.mxu0 0.0
        %252 = vmatprep.subr.mxu0 0.0
        %253 = vmatpush1.msra.mxu0 0.0
        %254 = vmatprep.subr.mxu0 0.0
        %255 = vmatpush1.msra.mxu0 0.0
        %256 = vmatprep.subr.mxu0 0.0
        %257 = vmatpush1.msra.mxu0 0.0
        %258 = vmatprep.subr.mxu0 0.0
        %259 = vmatpush1.msra.mxu0 0.0
        %260 = vmatprep.subr.mxu0 0.0
        %261 = vmatpush1.msra.mxu0 0.0
        %262 = vmatprep.subr.mxu0 0.0
        %263 = vmatpush1.msra.mxu0 0.0
        %264 = vmatprep.subr.mxu0 0.0
        %265 = vmatpush1.msra.mxu0 0.0
        %266 = vmatprep.subr.mxu0 0.0
        %267 = vmatpush1.msra.mxu0 0.0
        %268 = vmatprep.subr.mxu0 0.0
        %269 = vmatpush1.msra.mxu0 0.0
        %270 = vmatprep.subr.mxu0 0.0
        %271 = vmatpush1.msra.mxu0 0.0
        %272 = vmatprep.subr.mxu0 0.0
        %273 = vmatpush1.msra.mxu0 0.0
        %274 = vmatprep.subr.mxu0 0.0
        %275 = vmatpush1.msra.mxu0 0.0
        %276 = vmatprep.subr.mxu0 0.0
        %277 = vmatpush1.msra.mxu0 0.0
        %278 = vmatprep.subr.mxu0 0.0
        %279 = vmatpush1.msra.mxu0 0.0
        %280 = vmatprep.subr.mxu0 0.0
        %281 = vmatpush1.msra.mxu0 0.0
        %282 = vmatprep.subr.mxu0 0.0
        %283 = vmatpush1.msra.mxu0 0.0
        %284 = vmatprep.subr.mxu0 0.0
        %285 = vmatpush1.msra.mxu0 0.0
        %286 = vmatprep.subr.mxu0 0.0
        %287 = vmatpush1.msra.mxu0 0.0
        %288 = vmatprep.subr.mxu0 0.0
        %289 = vmatpush1.msra.mxu0 0.0
        %290 = vmatprep.subr.mxu0 0.0
        %291 = vmatpush1.msra.mxu0 0.0
        %292 = vmatprep.subr.mxu0 0.0
        %293 = vmatpush1.msra.mxu0 0.0
        %294 = vmatprep.subr.mxu0 0.0
        %295 = vmatpush1.msra.mxu0 0.0
        %296 = vmatprep.mubr.f32.mxu0 0.0
        %297 = vmatmul.mubr.f32.gmra.mrb[0].mxu0 %v227
        %v298 = vpop.f32.mrb[0].mxu0
        %v299 = vadd.f32 0.0, %v298
        %v300 = vpop.f32.mrb[0].mxu0
        %301 = vmatprep.mubr.f32.mxu0 0.0
        %302 = vmatmul.mubr.f32.gmra.mrb[0].mxu0 %v230
        %v303 = vpop.f32.mrb[0].mxu0
        %v304 = vadd.f32 0.0, %v303
        %v305 = vpop.f32.mrb[0].mxu0
        %306 = vdwg.mxu0
        %v307 = vlaneseq
        %v308 = vand.u32 %v307, 127
        %vm309 = vcmp.lt.s32.totalorder %v308, 16
        %v310 = vsel %vm309, %v299, 0.0
        %v311 = vsel %vm309, %v304, 0.0
        %312 = vadd.xlane.f32.xlu0 %v310
        %v313 = vpop.xlane.xlu0 %312
        %314 = vadd.xlane.f32.xlu0 %v311
        %v315 = vpop.xlane.xlu0 %314
        %v316 = vmul.f32 %v310, %v310
        %v317 = vmul.f32 %v311, %v311
        %318 = vadd.xlane.f32.xlu0 %v316
        %v319 = vpop.xlane.xlu0 %318
        %320 = vadd.xlane.f32.xlu0 %v317
        %v321 = vpop.xlane.xlu0 %320
        %v322 = vadd.f32 %v313, %v315
        %v323 = vmul.f32 %v322, 0.03125
        %v324 = vadd.f32 %v319, %v321
        %v325 = vmul.f32 %v324, 0.03125
        %v326 = vmul.f32 %v323, %v323
        %v327 = vsub.f32 %v325, %v326
        %v328 = vadd.f32 %v327, 1e-05
        %v329 = vrsqrt.pop %v328
        %v330 = vld [vmem:[%s2] sm:$0xff]
        %v331 = vmul.f32 %v329, %v330
        %v332 = vmul.f32 %v323, %v331
        %334 = vrot.lane.b32.xlu0 %v332, 1
        %v335 = vpop.permute.xlu0 %334
        %v337 = vsub.f32 %v330, %v335
        %339 = vset.pattern.permute.xlu0 0
        %340 = vperm.xlu0 %339, %v331
        %v341 = vpop.permute.xlu0 %340
        %v343 = vmul.f32 %v310, %v341
        %345 = vset.pattern.permute.xlu0 1
        %346 = vperm.xlu0 %345, %v337
        %v347 = vpop.permute.xlu0 %346
        %v349 = vadd.f32 %v343, %v347
        %v350 = vmul.f32 %v311, %v341
        %v351 = vadd.f32 %v350, %v347
        %v352 = vxor.u32 %v349, 2147483648
        %v353 = vmul.f32 %v352, 1.442695
        %v354 = vpow.pop %v353
        %v355 = vadd.f32 %v354, 1.0
        %v356 = vrcp.pop %v355
        %v357 = vmul.f32 1.0, %v356
        %v358 = vmul.f32 %v349, %v357
        %v359 = vxor.u32 %v351, 2147483648
        %v360 = vmul.f32 %v359, 1.442695
        %v361 = vpow.pop %v360
        %v362 = vadd.f32 %v361, 1.0
        %v363 = vrcp.pop %v362
        %v364 = vmul.f32 1.0, %v363
        %v365 = vmul.f32 %v351, %v364
        %vm366 = vcmask 125952
        %367 = vst.msk [vmem:[%s176] sm:$0xf] %vm366, %v358
        %369 = vrot.lane.b32.xlu0 %v365, 16
        %v370 = vpop.permute.xlu0 %369
        %vm372 = vcmask 257152
        %373 = vst.msk [vmem:[%s176] sm:$0xf] %vm372, %v370
        %s374 = sand.u32 %s94, 1
        %s375 = scalar_lea.sflag [#allocation5], %s374
        %s376 = sand.u32 %s94, 1
        %s377 = smul.addr %s376, 4
        %s378 = scalar_lea.vmem [#allocation6], %s377
        // Predicated region
        $region37: #{tpu_custom_call.1} parent=31 // pred_check
          %p379 = pneg %p104
        $region38: #{tpu_custom_call.1} parent=31 // pred_check_branch
          %381 = sbr.rel (%p379) target = $region40
        $region39: #{tpu_custom_call.1} parent=31 // pred_region
          %s383 = ssub.s32 64, 64
          %384 = vsyncadd %s375, %s383
          %s385 = smul.addr %s18, 64
          %s386 = scalar_lea.hbm %s3, %s385
          %s388 = sshll.u32 %s378, 4
          %s389 = int_to_ptr.vmem [resolvable:$true] %s388
          %391 = dma.vmem_to_hbm [thread:$0]  %s389, 64, %s386, %s375
        $region40: #{tpu_custom_call.1} parent=31 // pred_fallthru
          _
      $region32: #{tpu_custom_call.1} parent=5 // pred_fallthru
        _
      %p392 = scmp.le.s32.totalorder 2, %s13
      // Predicated region
      $region41: #{tpu_custom_call.1} parent=5 // pred_check
        %p393 = pneg %p392
      $region42: #{tpu_custom_call.1} parent=5 // pred_check_branch
        %395 = sbr.rel (%p393) target = $region44
      $region43: #{tpu_custom_call.1} parent=5 // pred_region
        %s396 = ssub.s32 %s13, 2
        // Predicated region
        $region45: #{tpu_custom_call.1} parent=43 // pred_check
          %p397 = pneg %p110
        $region46: #{tpu_custom_call.1} parent=43 // pred_check_branch
          %399 = sbr.rel (%p397) target = $region48
        $region47: #{tpu_custom_call.1} parent=43 // pred_region
          %s400 = sand.u32 %s95, 1
          %s401 = scalar_lea.sflag [#allocation5], %s400
          %s402 = sand.u32 %s95, 1
          %s403 = smul.addr %s402, 4
          %s404 = scalar_lea.vmem [#allocation6], %s403
          %405 = dma.done %s401, 64
        $region48: #{tpu_custom_call.1} parent=43 // pred_fallthru
          _
      $region44: #{tpu_custom_call.1} parent=5 // pred_fallthru
        _
    $region6: #{tpu_custom_call.1} parent=1 // loop_footer
      %s17 = sadd.s32 1, %s13
    $region7: #{tpu_custom_call.1} parent=1 // loop_footer_branch
      %12 = sbr.rel target = $region3
    $region8: #{tpu_custom_call.1} parent=1 // loop_exit
      _
    %406 = vsyncpa [#allocation4], 1
    %s407 = scalar_lea.sflag [#allocation4], 1
    %408 = vsyncpa %s407, 1
    %409 = vsyncpa [#allocation5], 1
    %s410 = scalar_lea.sflag [#allocation5], 1
    %411 = vsyncpa %s410, 1

</llo_original>
